<compile_context>
chip_gen: v7x
topology: tpu7x:2x2x1
jax: 0.10.0
libtpu: 0.0.40
codegen_flags: <defaults>
</compile_context>

<pallas_src>
import jax
import jax.numpy as jnp
from jax.experimental import pallas as pl
from jax.experimental.pallas import tpu as pltpu  # noqa: F401  (kept for parity / future use)


def _col_to_row(col):
    """(n, 1) column -> (1, n) lane-major row, using only iota/select/reduce.

    Avoids an explicit transpose/reshape op: M[i, j] = col[i, 0] * (i == j),
    then a sublane reduction over i gives row[0, j] = col[j, 0].
    """
    n = col.shape[0]
    sub = jax.lax.broadcasted_iota(jnp.int32, (n, n), 0)
    lane = jax.lax.broadcasted_iota(jnp.int32, (n, n), 1)
    return jnp.sum(jnp.where(sub == lane, col, 0.0), axis=0, keepdims=True)


def _rowdot_kernel(x1_ref, x2_ref, o_ref):
    x1 = x1_ref[...]                    # (3, 5) f32 — fits in one vreg
    w_row = _col_to_row(x2_ref[...])    # (5, 1) -> (1, 5) broadcast row
    # col[j, 0] = sum_k x1[j, k] * x2[k, 0]   (VPU mul + lane reduce; no MXU)
    col = jnp.sum(x1 * w_row, axis=1, keepdims=True)     # (3, 1)
    # Store lane-major (1, 3) directly — no wrapper-side transpose needed.
    o_ref[...] = _col_to_row(col)                        # (1, 3)


@jax.jit
def rowdot_cat(x1, x2):
    """Pallas equivalent of Model.forward: returns (1, 3) float32."""
    assert x1.shape == (3, 5) and x2.shape == (5, 1)
    return pl.pallas_call(
        _rowdot_kernel,
        out_shape=jax.ShapeDtypeStruct((1, 3), jnp.float32),
        in_specs=[
            pl.BlockSpec((3, 5), lambda: (0, 0)),   # block == full array
            pl.BlockSpec((5, 1), lambda: (0, 0)),
        ],
        out_specs=pl.BlockSpec((1, 3), lambda: (0, 0)),
        cost_estimate=pl.CostEstimate(
            flops=30,
            transcendentals=0,
            bytes_accessed=3 * 8 * 128 * 4,   # padded-tile traffic: 2 in + 1 out (8,128) f32 tiles
        ),
    )(x1, x2)


if __name__ == "__main__":
    key = jax.random.PRNGKey(0)
    k1, k2 = jax.random.split(key)
    # Shapes from the module's sample inputs: x1=(3,5), x2=(5,1)
    x1 = jax.random.normal(k1, (3, 5), dtype=jnp.float32)
    x2 = jax.random.normal(k2, (5, 1), dtype=jnp.float32)

    out = jax.block_until_ready(rowdot_cat(x1, x2))

    # Reference: cat of (1,1) blocks along dim 1 == (x1 @ x2).T
    ref = (x1 @ x2).T
    assert out.shape == (1, 3)
    assert jnp.allclose(out, ref, atol=1e-5, rtol=1e-5)

    print("KERNEL_OK")
</pallas_src>

<mosaic_0001>
module attributes {stable_mosaic.version = 11 : i64} {
  func.func @_rowdot_kernel(%arg0: memref<3x5xf32, #tpu.memory_space<vmem>>, %arg1: memref<5x1xf32, #tpu.memory_space<vmem>>, %arg2: memref<1x3xf32, #tpu.memory_space<vmem>>) attributes {dimension_semantics = [], scalar_prefetch = 0 : i64, scratch_operands = 0 : i64, tpu.core_type = #tpu.core_type<tc>} {
    %c0 = arith.constant 0 : index
    %c0_0 = arith.constant 0 : index
    %0 = vector.load %arg0[%c0, %c0_0] : memref<3x5xf32, #tpu.memory_space<vmem>>, vector<3x5xf32>
    %c0_1 = arith.constant 0 : index
    %c0_2 = arith.constant 0 : index
    %1 = vector.load %arg1[%c0_1, %c0_2] : memref<5x1xf32, #tpu.memory_space<vmem>>, vector<5x1xf32>
    %2 = tpu.iota {dimensions = array<i32: 0>} : vector<5x5xi32>
    %3 = tpu.iota {dimensions = array<i32: 1>} : vector<5x5xi32>
    %4 = arith.cmpi eq, %2, %3 : vector<5x5xi32>
    %cst = arith.constant 0.000000e+00 : f32
    %5 = vector.shape_cast %1 : vector<5x1xf32> to vector<5x1xf32>
    %6 = vector.broadcast %5 : vector<5x1xf32> to vector<5x5xf32>
    %7 = vector.broadcast %cst : f32 to vector<5x5xf32>
    %8 = arith.select %4, %6, %7 : vector<5x5xi1>, vector<5x5xf32>
    %cst_3 = arith.constant dense<0.000000e+00> : vector<5xf32>
    %9 = vector.multi_reduction <add>, %8, %cst_3 [0] : vector<5x5xf32> to vector<5xf32>
    %10 = vector.shape_cast %9 : vector<5xf32> to vector<1x5xf32>
    %11 = vector.broadcast %10 : vector<1x5xf32> to vector<3x5xf32>
    %12 = arith.mulf %0, %11 : vector<3x5xf32>
    %cst_4 = arith.constant dense<0.000000e+00> : vector<3xf32>
    %13 = vector.multi_reduction <add>, %12, %cst_4 [1] : vector<3x5xf32> to vector<3xf32>
    %14 = vector.shape_cast %13 : vector<3xf32> to vector<3x1xf32>
    %15 = tpu.iota {dimensions = array<i32: 0>} : vector<3x3xi32>
    %16 = tpu.iota {dimensions = array<i32: 1>} : vector<3x3xi32>
    %17 = arith.cmpi eq, %15, %16 : vector<3x3xi32>
    %cst_5 = arith.constant 0.000000e+00 : f32
    %18 = vector.shape_cast %14 : vector<3x1xf32> to vector<3x1xf32>
    %19 = vector.broadcast %18 : vector<3x1xf32> to vector<3x3xf32>
    %20 = vector.broadcast %cst_5 : f32 to vector<3x3xf32>
    %21 = arith.select %17, %19, %20 : vector<3x3xi1>, vector<3x3xf32>
    %cst_6 = arith.constant dense<0.000000e+00> : vector<3xf32>
    %22 = vector.multi_reduction <add>, %21, %cst_6 [0] : vector<3x3xf32> to vector<3xf32>
    %23 = vector.shape_cast %22 : vector<3xf32> to vector<1x3xf32>
    %c0_7 = arith.constant 0 : index
    %c0_8 = arith.constant 0 : index
    %24 = vector.load %arg2[%c0_7, %c0_8] : memref<1x3xf32, #tpu.memory_space<vmem>>, vector<1x3xf32>
    tpu.vector_store %arg2[%c0_7, %c0_8], %23 {strides = array<i32>} : memref<1x3xf32, #tpu.memory_space<vmem>>, vector<1x3xf32>,
    return
  }
}

</mosaic_0001>

<llo_original>
// kernel: rowdot_cat.1
$region0: #{rowdot_cat.1}
  #allocation0 [shape = 'u32[]', space=smem, size = 0x4, offset = 0x4, fixed_abs, tag = 'smem constant byte address 0x4 - core index']
  #allocation1 [shape = 'u32[144,128]{1,0:T(1,128)}', space=vmem, size = 0x12000, scoped, tag = 'internal scratch']
  %s0 = inlined_call_operand.vmem [shape: f32[3,5], index: 0, kind: input, shape index: {}]
  %s1 = inlined_call_operand.vmem [shape: f32[5,1], index: 1, kind: input, shape index: {}]
  %s2 = inlined_call_operand.hbm [shape: f32[1,3], index: 2, kind: output, shape index: {}]
  %s3 = sld [smem:[#allocation0]]
  $region18: #{rowdot_cat.1} parent=0
    _
  %s5 = ssub.s32 1, %s3
  %s6 = scalar_select 0, %s5, %s3
  $region1: #{rowdot_cat.1} parent=0
    #allocation2 [shape = 'u8[512]{0}', space=vmem, size = 0x400, scoped, tag = 'output window, operand 0, single buffered']
    #allocation3 [shape = 's32[1]{0}', space=sflag, size = 0x4, scoped, tag = 'scoped memory for rowdot_cat.1']
    %7 = vsyncpa [#allocation3], 0
    // Predicated region
    $region2: #{rowdot_cat.1} parent=1 // pred_check
      _
    $region3: #{rowdot_cat.1} parent=1 // pred_check_branch
      %9 = sbr.rel (0) target = $region5
    $region4: #{rowdot_cat.1} parent=1 // pred_region
      _
    $region5: #{rowdot_cat.1} parent=1 // pred_fallthru
      _
    // Predicated region
    $region6: #{rowdot_cat.1} parent=1 // pred_check
      _
    $region7: #{rowdot_cat.1} parent=1 // pred_check_branch
      %11 = sbr.rel (0) target = $region9
    $region8: #{rowdot_cat.1} parent=1 // pred_region
      _
    $region9: #{rowdot_cat.1} parent=1 // pred_fallthru
      _
    %v12 = vld [vmem:[%s0] sm:$0x7]
    %v13 = vld [vmem:[%s1] sm:$0x1f]
    %v14 = vlaneseq
    %v15 = vshrl.u32 %v14, 7
    %v16 = vlaneseq
    %v17 = vand.u32 %v16, 127
    %vm18 = vcmp.eq.s32.totalorder %v15, %v17
    %20 = vset.pattern.permute.xlu0 0
    %21 = vperm.xlu0 %20, %v13
    %v22 = vpop.permute.xlu0 %21
    %v24 = vsel %vm18, %v22, 0.0
    %vm25 = vcmask 36864
    %v26 = vsel %vm25, %v24, 0.0
    %v27 = vrot.slane %v26, 4
    %v28 = vadd.f32 %v26, %v27
    %v29 = vrot.slane %v28, 2
    %v30 = vadd.f32 %v28, %v29
    %v31 = vrot.slane %v30, 1
    %v32 = vadd.f32 %v30, %v31
    %v33 = vmul.f32 %v12, %v32
    %vm34 = vcmask 34816
    %v35 = vsel %vm34, %v33, 0.0
    %36 = vadd.xlane.f32.xlu0 %v35
    %v37 = vpop.xlane.xlu0 %36
    %v38 = vsel %vm18, %v37, 0.0
    %vm39 = vcmask 18432
    %v40 = vsel %vm39, %v38, 0.0
    %v41 = vrot.slane %v40, 4
    %v42 = vadd.f32 %v40, %v41
    %v43 = vrot.slane %v42, 2
    %v44 = vadd.f32 %v42, %v43
    %v45 = vrot.slane %v44, 1
    %v46 = vadd.f32 %v44, %v45
    %vm47 = vcmask 16384
    %48 = vst.msk [vmem:[#allocation2] sm:$0x1] %vm47, %v46
    // Predicated region
    $region10: #{rowdot_cat.1} parent=1 // pred_check
      _
    $region11: #{rowdot_cat.1} parent=1 // pred_check_branch
      %50 = sbr.rel (0) target = $region13
    $region12: #{rowdot_cat.1} parent=1 // pred_region
      %s52 = ssub.s32 16, 16
      %53 = vsyncadd [#allocation3], %s52
      %s55 = sshll.u32 [#allocation2], 4
      %s56 = int_to_ptr.vmem [resolvable:$true] %s55
      %58 = dma.vmem_to_hbm [thread:$0]  %s56, 16, %s2, [#allocation3]
    $region13: #{rowdot_cat.1} parent=1 // pred_fallthru
      _
    // Predicated region
    $region14: #{rowdot_cat.1} parent=1 // pred_check
      _
    $region15: #{rowdot_cat.1} parent=1 // pred_check_branch
      %60 = sbr.rel (0) target = $region17
    $region16: #{rowdot_cat.1} parent=1 // pred_region
      %61 = dma.done [#allocation3], 16
    $region17: #{rowdot_cat.1} parent=1 // pred_fallthru
      _
    %62 = vsyncpa [#allocation3], 1

</llo_original>
